<compile_context>
chip_gen: v6e
topology: v6e:2x2x1
jax: 0.10.0
libtpu: 0.0.40
codegen_flags: <defaults>
</compile_context>

<pallas_src>
import functools

import jax
import jax.numpy as jnp
from jax.experimental import pallas as pl
from jax.experimental.pallas import tpu as pltpu


BN_EPS = 1e-5

D_IN = 44        # real input features
D_PAD = 128      # lane-padded input features (col 44 = bias carrier "1")
H1 = 1000        # real hidden width
H1_PAD = 1024    # lane-padded hidden width (col 1000 = bias carrier "1")
H2 = 44          # real second hidden width
H2_PAD = 128     # lane-padded second hidden width (col 44 = bias carrier "1")
HEAD_PAD = 128   # lane-padded fused-head output width
MAX_TB = 256     # batch-tile cap: >=2 grid steps for B>=257 (feeds both v7x TCs)


def _round_up(n, m):
    return (n + m - 1) // m * m


def _mlp_heads_kernel(x_ref, w1_ref, w2_ref, wh_ref, out_ref, *, relu_in_bf16):
    # Linear(44,1000)+BN+bias folded into w1 (bias rides the ones-lane of x). Dropout(0.8)=id.
    h = jnp.dot(x_ref[...], w1_ref[...], preferred_element_type=jnp.float32)
    if relu_in_bf16:
        h = jnp.maximum(h.astype(jnp.bfloat16), 0.0)        # bf16 VPU (v6e/v7x)
    else:
        h = jnp.maximum(h, 0.0).astype(jnp.bfloat16)         # f32 VPU (v5e and older)

    # Linear(1000,44)+BN+bias folded into w2 (bias rides carrier lane h[:,1000]==1).
    h2 = jnp.dot(h, w2_ref[...], preferred_element_type=jnp.float32)
    if relu_in_bf16:
        h2 = jnp.maximum(h2.astype(jnp.bfloat16), 0.0)
    else:
        h2 = jnp.maximum(h2, 0.0).astype(jnp.bfloat16)

    # Dropout(0.6)=id; 9 fused heads, biases ride carrier lane h2[:,44]==1. Lane-dense store.
    out_ref[...] = jnp.dot(h2, wh_ref[...], preferred_element_type=jnp.float32)


def prepare_params(params, head_sizes):
    """One-time: fold BN (running stats) + biases into padded bf16 weights. Keep off hot path."""
    total_heads = sum(head_sizes)
    assert total_heads <= HEAD_PAD, "sum(head_sizes) must fit the 128-lane fused head"

    # ---- Fold BatchNorm (running stats, eps=1e-5) + linear bias, all in f32 ----
    scale1 = params["bn1_gamma"] / jnp.sqrt(params["bn1_var"] + BN_EPS)          # (1,1000)
    w1f = params["w1"] * scale1                                                   # (44,1000)
    b1f = (params["b1"] - params["bn1_mean"]) * scale1 + params["bn1_beta"]       # (1,1000)

    scale2 = params["bn2_gamma"] / jnp.sqrt(params["bn2_var"] + BN_EPS)           # (1,44)
    w2f = params["w2"] * scale2                                                   # (1000,44)
    b2f = (params["b2"] - params["bn2_mean"]) * scale2 + params["bn2_beta"]       # (1,44)

    # ---- Pad to lane-aligned tiles; fold biases into carrier rows; cast bf16 last ----
    w1_p = jnp.zeros((D_PAD, H1_PAD), jnp.float32)
    w1_p = w1_p.at[:D_IN, :H1].set(w1f)
    w1_p = w1_p.at[D_IN, :H1].set(b1f[0])          # bias row, picked up by x ones-lane
    w1_p = w1_p.at[D_IN, H1].set(1.0)              # carrier: h[:,1000] = 1
    w1_p = w1_p.astype(jnp.bfloat16)

    w2_p = jnp.zeros((H1_PAD, H2_PAD), jnp.float32)
    w2_p = w2_p.at[:H1, :H2].set(w2f)
    w2_p = w2_p.at[H1, :H2].set(b2f[0])            # bias row, picked up by h carrier lane
    w2_p = w2_p.at[H1, H2].set(1.0)                # carrier: h2[:,44] = 1
    w2_p = w2_p.astype(jnp.bfloat16)

    wh_p = jnp.zeros((H2_PAD, HEAD_PAD), jnp.float32)
    wh_p = wh_p.at[:H2, :total_heads].set(params["wh"])
    wh_p = wh_p.at[H2, :total_heads].set(params["bh"][0])   # head biases via h2 carrier lane
    wh_p = wh_p.astype(jnp.bfloat16)

    return {"w1p": w1_p, "w2p": w2_p, "whp": wh_p}


@functools.partial(jax.jit, static_argnames=("head_sizes", "relu_in_bf16"))
def mlp_with_uncertainty_forward(x, prepared, head_sizes, relu_in_bf16=False):
    """x: (B, ...) flattened to (B, 44). Returns [tuple of 9 per-task logit arrays]."""
    B = x.shape[0]
    x2d = x.reshape(B, -1)
    assert x2d.shape[1] == D_IN, "flattened feature dim must be 44"

    # ---- Adaptive batch tile: <=16 dead rows per tile, >=2 tiles once B > MAX_TB ----
    n_tiles = max(1, -(-B // MAX_TB))                 # ceil(B / 256)
    TB = _round_up(-(-B // n_tiles), 16)              # even split, multiple of 16 (bf16 sublanes)
    B_pad = n_tiles * TB

    # ---- Pad x directly in bf16; column 44 is the bias-carrier "1" lane ----
    x_p = jnp.zeros((B_pad, D_PAD), jnp.bfloat16)
    x_p = x_p.at[:B, :D_IN].set(x2d.astype(jnp.bfloat16))
    x_p = x_p.at[:, D_IN].set(jnp.bfloat16(1.0))

    out = pl.pallas_call(
        functools.partial(_mlp_heads_kernel, relu_in_bf16=relu_in_bf16),
        out_shape=jax.ShapeDtypeStruct((B_pad, HEAD_PAD), jnp.float32),
        grid_spec=pltpu.PrefetchScalarGridSpec(
            num_scalar_prefetch=0,
            grid=(n_tiles,),
            in_specs=[
                pl.BlockSpec((TB, D_PAD), lambda i: (i, 0)),           # x: tiled over batch
                pl.BlockSpec((D_PAD, H1_PAD), lambda i: (0, 0)),       # w1: resident
                pl.BlockSpec((H1_PAD, H2_PAD), lambda i: (0, 0)),      # w2: resident
                pl.BlockSpec((H2_PAD, HEAD_PAD), lambda i: (0, 0)),    # wh: resident
            ],
            out_specs=pl.BlockSpec((TB, HEAD_PAD), lambda i: (i, 0)),  # lane-dense output
        ),
        compiler_params=pltpu.CompilerParams(
            dimension_semantics=("parallel",),
        ),
    )(x_p, prepared["w1p"], prepared["w2p"], prepared["whp"])

    out = out[:B]
    # split fused head output back into the 9 per-task logits
    logits, off = [], 0
    for n in head_sizes:
        logits.append(out[:, off:off + n])
        off += n
    return [tuple(logits)]


def _use_bf16_relu():
    """bf16 VPU exists on v6e/v7x; keep f32 elementwise on v5e and older."""
    try:
        kind = jax.devices()[0].device_kind.lower()
    except Exception:
        return False
    return ("v6" in kind) or ("v7" in kind)


def init_params(key, head_sizes):
    ks = jax.random.split(key, 8)
    total_heads = sum(head_sizes)
    return {
        "w1": jax.random.normal(ks[0], (44, 1000), jnp.float32) * 0.05,
        "b1": jax.random.normal(ks[1], (1, 1000), jnp.float32) * 0.05,
        "bn1_gamma": jnp.ones((1, 1000), jnp.float32),
        "bn1_beta": jnp.zeros((1, 1000), jnp.float32),
        "bn1_mean": jax.random.normal(ks[2], (1, 1000), jnp.float32) * 0.01,
        "bn1_var": jnp.abs(jax.random.normal(ks[3], (1, 1000), jnp.float32)) * 0.1 + 1.0,
        "w2": jax.random.normal(ks[4], (1000, 44), jnp.float32) * 0.02,
        "b2": jax.random.normal(ks[5], (1, 44), jnp.float32) * 0.05,
        "bn2_gamma": jnp.ones((1, 44), jnp.float32),
        "bn2_beta": jnp.zeros((1, 44), jnp.float32),
        "bn2_mean": jnp.zeros((1, 44), jnp.float32),
        "bn2_var": jnp.ones((1, 44), jnp.float32),
        "wh": jax.random.normal(ks[6], (44, total_heads), jnp.float32) * 0.1,
        "bh": jax.random.normal(ks[7], (1, total_heads), jnp.float32) * 0.1,
    }


def reference_forward(x, params, head_sizes):
    """Plain-JAX f32 reference for correctness checking (eval-mode PyTorch semantics)."""
    B = x.shape[0]
    h = x.reshape(B, -1).astype(jnp.float32) @ params["w1"] + params["b1"]
    h = (h - params["bn1_mean"]) * (
        params["bn1_gamma"] / jnp.sqrt(params["bn1_var"] + BN_EPS)
    ) + params["bn1_beta"]
    h = jnp.maximum(h, 0.0)
    h = h @ params["w2"] + params["b2"]
    h = (h - params["bn2_mean"]) * (
        params["bn2_gamma"] / jnp.sqrt(params["bn2_var"] + BN_EPS)
    ) + params["bn2_beta"]
    h = jnp.maximum(h, 0.0)
    out = h @ params["wh"] + params["bh"]
    logits, off = [], 0
    for n in head_sizes:
        logits.append(out[:, off:off + n])
        off += n
    return [tuple(logits)]


if __name__ == "__main__":
    # class_list = [num_label, num_pn, num_str, num_pig, num_rs, num_dag, num_bwv, num_vs, num_uncertainty]
    class_list = (5, 3, 3, 3, 2, 3, 2, 3, 2)

    key = jax.random.PRNGKey(0)
    k_x, k_p = jax.random.split(key)

    B = 8
    x = jax.random.normal(k_x, (B, 44), jnp.float32)   # already-flattened (B, 44) input
    params = init_params(k_p, class_list)

    # One-time fold/pad (kept out of the per-call hot path).
    prepared = jax.block_until_ready(prepare_params(params, class_list))
    relu_in_bf16 = _use_bf16_relu()

    out = mlp_with_uncertainty_forward(x, prepared, class_list, relu_in_bf16)
    out = jax.block_until_ready(out)

    ref = reference_forward(x, params, class_list)
    for a, b in zip(out[0], ref[0]):
        assert a.shape == b.shape
        # bf16 matmul operands (weights + folded biases) with f32 accumulation -> relaxed tolerance
        assert jnp.allclose(a, b, atol=2e-2, rtol=2e-2), "mismatch vs reference"

    print("KERNEL_OK")
</pallas_src>

<mosaic_0001>
module attributes {stable_mosaic.version = 11 : i64} {
  func.func @_mlp_heads_kernel(%arg0: i32, %arg1: memref<16x128xbf16, #tpu.memory_space<vmem>>, %arg2: memref<128x1024xbf16, #tpu.memory_space<vmem>>, %arg3: memref<1024x128xbf16, #tpu.memory_space<vmem>>, %arg4: memref<128x128xbf16, #tpu.memory_space<vmem>>, %arg5: memref<16x128xf32, #tpu.memory_space<vmem>>) attributes {dimension_semantics = [#tpu.dimension_semantics<parallel>], iteration_bounds = array<i64: 1>, scalar_prefetch = 0 : i64, scratch_operands = 0 : i64, tpu.core_type = #tpu.core_type<tc>, window_params = [{transform_indices = @transform_0, window_bounds = array<i64: 16, 128>}, {pipeline_mode = #tpu.pipeline_mode<synchronous>, transform_indices = @transform_1, window_bounds = array<i64: 128, 1024>}, {pipeline_mode = #tpu.pipeline_mode<synchronous>, transform_indices = @transform_2, window_bounds = array<i64: 1024, 128>}, {pipeline_mode = #tpu.pipeline_mode<synchronous>, transform_indices = @transform_3, window_bounds = array<i64: 128, 128>}, {transform_indices = @transform_4, window_bounds = array<i64: 16, 128>}]} {
    %c0 = arith.constant 0 : index
    %c0_0 = arith.constant 0 : index
    %0 = vector.load %arg1[%c0, %c0_0] : memref<16x128xbf16, #tpu.memory_space<vmem>>, vector<16x128xbf16>
    %c0_1 = arith.constant 0 : index
    %c0_2 = arith.constant 0 : index
    %1 = vector.load %arg2[%c0_1, %c0_2] : memref<128x1024xbf16, #tpu.memory_space<vmem>>, vector<128x1024xbf16>
    %cst = arith.constant dense<0.000000e+00> : vector<16x1024xf32>
    %2 = tpu.matmul %0, %1, %cst {dimension_numbers = #tpu.dot_dimension_numbers<[1], [0], [0], [1], [0, 0, 1, 1], [], []>} : vector<16x128xbf16>, vector<128x1024xbf16>, vector<16x1024xf32> -> vector<16x1024xf32>
    %cst_3 = arith.constant 0.000000e+00 : f32
    %3 = vector.broadcast %cst_3 : f32 to vector<16x1024xf32>
    %4 = arith.maximumf %2, %3 : vector<16x1024xf32>
    %5 = arith.truncf %4 : vector<16x1024xf32> to vector<16x1024xbf16>
    %c0_4 = arith.constant 0 : index
    %c0_5 = arith.constant 0 : index
    %6 = vector.load %arg3[%c0_4, %c0_5] : memref<1024x128xbf16, #tpu.memory_space<vmem>>, vector<1024x128xbf16>
    %cst_6 = arith.constant dense<0.000000e+00> : vector<16x128xf32>
    %7 = tpu.matmul %5, %6, %cst_6 {dimension_numbers = #tpu.dot_dimension_numbers<[1], [0], [0], [1], [0, 0, 1, 1], [], []>} : vector<16x1024xbf16>, vector<1024x128xbf16>, vector<16x128xf32> -> vector<16x128xf32>
    %cst_7 = arith.constant 0.000000e+00 : f32
    %8 = vector.broadcast %cst_7 : f32 to vector<16x128xf32>
    %9 = arith.maximumf %7, %8 : vector<16x128xf32>
    %10 = arith.truncf %9 : vector<16x128xf32> to vector<16x128xbf16>
    %c0_8 = arith.constant 0 : index
    %c0_9 = arith.constant 0 : index
    %11 = vector.load %arg4[%c0_8, %c0_9] : memref<128x128xbf16, #tpu.memory_space<vmem>>, vector<128x128xbf16>
    %cst_10 = arith.constant dense<0.000000e+00> : vector<16x128xf32>
    %12 = tpu.matmul %10, %11, %cst_10 {dimension_numbers = #tpu.dot_dimension_numbers<[1], [0], [0], [1], [0, 0, 1, 1], [], []>} : vector<16x128xbf16>, vector<128x128xbf16>, vector<16x128xf32> -> vector<16x128xf32>
    %c0_11 = arith.constant 0 : index
    %c0_12 = arith.constant 0 : index
    %13 = vector.load %arg5[%c0_11, %c0_12] : memref<16x128xf32, #tpu.memory_space<vmem>>, vector<16x128xf32>
    tpu.vector_store %arg5[%c0_11, %c0_12], %12 {strides = array<i32>} : memref<16x128xf32, #tpu.memory_space<vmem>>, vector<16x128xf32>,
    return
  }
  func.func @transform_0(%arg0: i32) -> (i32, i32) {
    %c0_i32 = arith.constant 0 : i32
    %c0_i32_0 = arith.constant 0 : i32
    return %arg0, %c0_i32 : i32, i32
  }
  func.func @transform_1(%arg0: i32) -> (i32, i32) {
    %c0_i32 = arith.constant 0 : i32
    %c0_i32_0 = arith.constant 0 : i32
    %c0_i32_1 = arith.constant 0 : i32
    return %c0_i32, %c0_i32_0 : i32, i32
  }
  func.func @transform_2(%arg0: i32) -> (i32, i32) {
    %c0_i32 = arith.constant 0 : i32
    %c0_i32_0 = arith.constant 0 : i32
    %c0_i32_1 = arith.constant 0 : i32
    return %c0_i32, %c0_i32_0 : i32, i32
  }
  func.func @transform_3(%arg0: i32) -> (i32, i32) {
    %c0_i32 = arith.constant 0 : i32
    %c0_i32_0 = arith.constant 0 : i32
    %c0_i32_1 = arith.constant 0 : i32
    return %c0_i32, %c0_i32_0 : i32, i32
  }
  func.func @transform_4(%arg0: i32) -> (i32, i32) {
    %c0_i32 = arith.constant 0 : i32
    %c0_i32_0 = arith.constant 0 : i32
    return %arg0, %c0_i32 : i32, i32
  }
}

</mosaic_0001>

<llo_original>
// kernel: mlp_with_uncertainty_forward.1
$region0: #{mlp_with_uncertainty_forward.1}
  #allocation0 [shape = 'u32[]', space=smem, size = 0x4, offset = 0x4, fixed_abs, tag = 'smem constant byte address 0x4 - core index']
  #allocation1 [shape = 'u32[144,128]{1,0:T(1,128)}', space=vmem, size = 0x12000, scoped, tag = 'internal scratch']
  %s0 = inlined_call_operand.vmem [shape: bf16[16,128], index: 0, kind: input, shape index: {}]
  %s1 = inlined_call_operand.hbm [shape: bf16[128,1024], index: 1, kind: input, shape index: {}]
  %s2 = inlined_call_operand.hbm [shape: bf16[1024,128], index: 2, kind: input, shape index: {}]
  %s3 = inlined_call_operand.hbm [shape: bf16[128,128], index: 3, kind: input, shape index: {}]
  %s4 = inlined_call_operand.vmem [shape: f32[16,128], index: 4, kind: output, shape index: {}]
  %s5 = sld [smem:[#allocation0]]
  $region38: #{mlp_with_uncertainty_forward.1} parent=0
    _
  %s7 = ssub.s32 1, %s5
  %s8 = scalar_select 0, %s7, %s5
  $region1: #{mlp_with_uncertainty_forward.1} parent=0
    #allocation2 [shape = 'u8[262144]{0}', space=vmem, size = 0x40000, scoped, tag = 'input window, operand 1, single buffered']
    #allocation3 [shape = 's32[1]{0}', space=sflag, size = 0x4, scoped, tag = 'scoped memory for mlp_with_uncertainty_forward.1']
    #allocation4 [shape = 'u8[262144]{0}', space=vmem, size = 0x40000, scoped, tag = 'input window, operand 2, single buffered']
    #allocation5 [shape = 's32[1]{0}', space=sflag, size = 0x4, scoped, tag = 'scoped memory for mlp_with_uncertainty_forward.1']
    #allocation6 [shape = 'u8[32768]{0}', space=vmem, size = 0x8000, scoped, tag = 'input window, operand 3, single buffered']
    %9 = vsyncpa [#allocation3], 0
    %10 = vsyncpa [#allocation5], 0
    // Predicated region
    $region2: #{mlp_with_uncertainty_forward.1} parent=1 // pred_check
      _
    $region3: #{mlp_with_uncertainty_forward.1} parent=1 // pred_check_branch
      %12 = sbr.rel (0) target = $region5
    $region4: #{mlp_with_uncertainty_forward.1} parent=1 // pred_region
      _
    $region5: #{mlp_with_uncertainty_forward.1} parent=1 // pred_fallthru
      _
    // Predicated region
    $region6: #{mlp_with_uncertainty_forward.1} parent=1 // pred_check
      _
    $region7: #{mlp_with_uncertainty_forward.1} parent=1 // pred_check_branch
      %14 = sbr.rel (0) target = $region9
    $region8: #{mlp_with_uncertainty_forward.1} parent=1 // pred_region
      %s16 = ssub.s32 8192, 8192
      %17 = vsyncadd [#allocation3], %s16
      %s18 = sshll.u32 [#allocation2], 4
      %s19 = int_to_ptr.vmem [resolvable:$true] %s18
      %24 = dma.hbm_to_vmem [thread:$0]  %s1, 8192, %s19, [#allocation3], 512, 512, 32
    $region9: #{mlp_with_uncertainty_forward.1} parent=1 // pred_fallthru
      _
    // Predicated region
    $region10: #{mlp_with_uncertainty_forward.1} parent=1 // pred_check
      _
    $region11: #{mlp_with_uncertainty_forward.1} parent=1 // pred_check_branch
      %26 = sbr.rel (0) target = $region13
    $region12: #{mlp_with_uncertainty_forward.1} parent=1 // pred_region
      %s28 = ssub.s32 8192, 8192
      %29 = vsyncadd [#allocation5], %s28
      %s30 = sshll.u32 [#allocation4], 4
      %s31 = int_to_ptr.vmem [resolvable:$true] %s30
      %36 = dma.hbm_to_vmem [thread:$0]  %s2, 8192, %s31, [#allocation5], 64, 64, 4
    $region13: #{mlp_with_uncertainty_forward.1} parent=1 // pred_fallthru
      _
    // Predicated region
    $region14: #{mlp_with_uncertainty_forward.1} parent=1 // pred_check
      _
    $region15: #{mlp_with_uncertainty_forward.1} parent=1 // pred_check_branch
      %38 = sbr.rel (0) target = $region17
    $region16: #{mlp_with_uncertainty_forward.1} parent=1 // pred_region
      %s40 = ssub.s32 1024, 1024
      %41 = vsyncadd [#allocation5], %s40
      %s42 = sshll.u32 [#allocation6], 4
      %s43 = int_to_ptr.vmem [resolvable:$true] %s42
      %48 = dma.hbm_to_vmem [thread:$0]  %s3, 1024, %s43, [#allocation5], 64, 64, 4
    $region17: #{mlp_with_uncertainty_forward.1} parent=1 // pred_fallthru
      _
    // Predicated region
    $region18: #{mlp_with_uncertainty_forward.1} parent=1 // pred_check
      _
    $region19: #{mlp_with_uncertainty_forward.1} parent=1 // pred_check_branch
      %50 = sbr.rel (0) target = $region21
    $region20: #{mlp_with_uncertainty_forward.1} parent=1 // pred_region
      %51 = dma.done [#allocation3], 8192
    $region21: #{mlp_with_uncertainty_forward.1} parent=1 // pred_fallthru
      _
    // Predicated region
    $region22: #{mlp_with_uncertainty_forward.1} parent=1 // pred_check
      _
    $region23: #{mlp_with_uncertainty_forward.1} parent=1 // pred_check_branch
      %53 = sbr.rel (0) target = $region25
    $region24: #{mlp_with_uncertainty_forward.1} parent=1 // pred_region
      %54 = dma.done [#allocation5], 8192
    $region25: #{mlp_with_uncertainty_forward.1} parent=1 // pred_fallthru
      _
    // Predicated region
    $region26: #{mlp_with_uncertainty_forward.1} parent=1 // pred_check
      _
    $region27: #{mlp_with_uncertainty_forward.1} parent=1 // pred_check_branch
      %56 = sbr.rel (0) target = $region29
    $region28: #{mlp_with_uncertainty_forward.1} parent=1 // pred_region
      %57 = dma.done [#allocation5], 1024
    $region29: #{mlp_with_uncertainty_forward.1} parent=1 // pred_fallthru
      _
    %v59 = vld [vmem:[%s0] sm:$0xf]
    %v60 = vld [vmem:[%s0 + $0x4] sm:$0xf]
    %v61 = vld [vmem:[#allocation2] sm:$0xff]
    %v62 = vld [vmem:[#allocation2 + $0x8] sm:$0xff]
    %v63 = vld [vmem:[#allocation2 + $0x10] sm:$0xff]
    %v64 = vld [vmem:[#allocation2 + $0x18] sm:$0xff]
    %v65 = vld [vmem:[#allocation2 + $0x20] sm:$0xff]
    %v66 = vld [vmem:[#allocation2 + $0x28] sm:$0xff]
    %v67 = vld [vmem:[#allocation2 + $0x30] sm:$0xff]
    %v68 = vld [vmem:[#allocation2 + $0x38] sm:$0xff]
    %v69 = vld [vmem:[#allocation2 + $0x40] sm:$0xff]
    %v70 = vld [vmem:[#allocation2 + $0x48] sm:$0xff]
    %v71 = vld [vmem:[#allocation2 + $0x50] sm:$0xff]
    %v72 = vld [vmem:[#allocation2 + $0x58] sm:$0xff]
    %v73 = vld [vmem:[#allocation2 + $0x60] sm:$0xff]
    %v74 = vld [vmem:[#allocation2 + $0x68] sm:$0xff]
    %v75 = vld [vmem:[#allocation2 + $0x70] sm:$0xff]
    %v76 = vld [vmem:[#allocation2 + $0x78] sm:$0xff]
    %v77 = vld [vmem:[#allocation2 + $0x80] sm:$0xff]
    %v78 = vld [vmem:[#allocation2 + $0x88] sm:$0xff]
    %v79 = vld [vmem:[#allocation2 + $0x90] sm:$0xff]
    %v80 = vld [vmem:[#allocation2 + $0x98] sm:$0xff]
    %v81 = vld [vmem:[#allocation2 + $0xa0] sm:$0xff]
    %v82 = vld [vmem:[#allocation2 + $0xa8] sm:$0xff]
    %v83 = vld [vmem:[#allocation2 + $0xb0] sm:$0xff]
    %v84 = vld [vmem:[#allocation2 + $0xb8] sm:$0xff]
    %v85 = vld [vmem:[#allocation2 + $0xc0] sm:$0xff]
    %v86 = vld [vmem:[#allocation2 + $0xc8] sm:$0xff]
    %v87 = vld [vmem:[#allocation2 + $0xd0] sm:$0xff]
    %v88 = vld [vmem:[#allocation2 + $0xd8] sm:$0xff]
    %v89 = vld [vmem:[#allocation2 + $0xe0] sm:$0xff]
    %v90 = vld [vmem:[#allocation2 + $0xe8] sm:$0xff]
    %v91 = vld [vmem:[#allocation2 + $0xf0] sm:$0xff]
    %v92 = vld [vmem:[#allocation2 + $0xf8] sm:$0xff]
    %v93 = vld [vmem:[#allocation2 + $0x100] sm:$0xff]
    %v94 = vld [vmem:[#allocation2 + $0x108] sm:$0xff]
    %v95 = vld [vmem:[#allocation2 + $0x110] sm:$0xff]
    %v96 = vld [vmem:[#allocation2 + $0x118] sm:$0xff]
    %v97 = vld [vmem:[#allocation2 + $0x120] sm:$0xff]
    %v98 = vld [vmem:[#allocation2 + $0x128] sm:$0xff]
    %v99 = vld [vmem:[#allocation2 + $0x130] sm:$0xff]
    %v100 = vld [vmem:[#allocation2 + $0x138] sm:$0xff]
    %v101 = vld [vmem:[#allocation2 + $0x140] sm:$0xff]
    %v102 = vld [vmem:[#allocation2 + $0x148] sm:$0xff]
    %v103 = vld [vmem:[#allocation2 + $0x150] sm:$0xff]
    %v104 = vld [vmem:[#allocation2 + $0x158] sm:$0xff]
    %v105 = vld [vmem:[#allocation2 + $0x160] sm:$0xff]
    %v106 = vld [vmem:[#allocation2 + $0x168] sm:$0xff]
    %v107 = vld [vmem:[#allocation2 + $0x170] sm:$0xff]
    %v108 = vld [vmem:[#allocation2 + $0x178] sm:$0xff]
    %v109 = vld [vmem:[#allocation2 + $0x180] sm:$0xff]
    %v110 = vld [vmem:[#allocation2 + $0x188] sm:$0xff]
    %v111 = vld [vmem:[#allocation2 + $0x190] sm:$0xff]
    %v112 = vld [vmem:[#allocation2 + $0x198] sm:$0xff]
    %v113 = vld [vmem:[#allocation2 + $0x1a0] sm:$0xff]
    %v114 = vld [vmem:[#allocation2 + $0x1a8] sm:$0xff]
    %v115 = vld [vmem:[#allocation2 + $0x1b0] sm:$0xff]
    %v116 = vld [vmem:[#allocation2 + $0x1b8] sm:$0xff]
    %v117 = vld [vmem:[#allocation2 + $0x1c0] sm:$0xff]
    %v118 = vld [vmem:[#allocation2 + $0x1c8] sm:$0xff]
    %v119 = vld [vmem:[#allocation2 + $0x1d0] sm:$0xff]
    %v120 = vld [vmem:[#allocation2 + $0x1d8] sm:$0xff]
    %v121 = vld [vmem:[#allocation2 + $0x1e0] sm:$0xff]
    %v122 = vld [vmem:[#allocation2 + $0x1e8] sm:$0xff]
    %v123 = vld [vmem:[#allocation2 + $0x1f0] sm:$0xff]
    %v124 = vld [vmem:[#allocation2 + $0x1f8] sm:$0xff]
    %v127 = vunpack.c.l.b16 %v59
    %v128 = vunpack.c.l.b16 %v60
    %v129 = vpack.c.b16 %v128, %v127
    %v195 = vunpack.c.l.b16 %v61
    %v196 = vunpack.c.h.b16 %v61
    %v197 = vunpack.c.l.b16 %v62
    %v198 = vunpack.c.h.b16 %v62
    %v199 = vunpack.c.l.b16 %v63
    %v200 = vunpack.c.h.b16 %v63
    %v201 = vunpack.c.l.b16 %v64
    %v202 = vunpack.c.h.b16 %v64
    %v203 = vunpack.c.l.b16 %v65
    %v204 = vunpack.c.h.b16 %v65
    %v205 = vunpack.c.l.b16 %v66
    %v206 = vunpack.c.h.b16 %v66
    %v207 = vunpack.c.l.b16 %v67
    %v208 = vunpack.c.h.b16 %v67
    %v209 = vunpack.c.l.b16 %v68
    %v210 = vunpack.c.h.b16 %v68
    %v211 = vunpack.c.l.b16 %v69
    %v212 = vunpack.c.h.b16 %v69
    %v213 = vunpack.c.l.b16 %v70
    %v214 = vunpack.c.h.b16 %v70
    %v215 = vunpack.c.l.b16 %v71
    %v216 = vunpack.c.h.b16 %v71
    %v217 = vunpack.c.l.b16 %v72
    %v218 = vunpack.c.h.b16 %v72
    %v219 = vunpack.c.l.b16 %v73
    %v220 = vunpack.c.h.b16 %v73
    %v221 = vunpack.c.l.b16 %v74
    %v222 = vunpack.c.h.b16 %v74
    %v223 = vunpack.c.l.b16 %v75
    %v224 = vunpack.c.h.b16 %v75
    %v225 = vunpack.c.l.b16 %v76
    %v226 = vunpack.c.h.b16 %v76
    %v227 = vunpack.c.l.b16 %v77
    %v228 = vunpack.c.h.b16 %v77
    %v229 = vunpack.c.l.b16 %v78
    %v230 = vunpack.c.h.b16 %v78
    %v231 = vunpack.c.l.b16 %v79
    %v232 = vunpack.c.h.b16 %v79
    %v233 = vunpack.c.l.b16 %v80
    %v234 = vunpack.c.h.b16 %v80
    %v235 = vunpack.c.l.b16 %v81
    %v236 = vunpack.c.h.b16 %v81
    %v237 = vunpack.c.l.b16 %v82
    %v238 = vunpack.c.h.b16 %v82
    %v239 = vunpack.c.l.b16 %v83
    %v240 = vunpack.c.h.b16 %v83
    %v241 = vunpack.c.l.b16 %v84
    %v242 = vunpack.c.h.b16 %v84
    %v243 = vunpack.c.l.b16 %v85
    %v244 = vunpack.c.h.b16 %v85
    %v245 = vunpack.c.l.b16 %v86
    %v246 = vunpack.c.h.b16 %v86
    %v247 = vunpack.c.l.b16 %v87
    %v248 = vunpack.c.h.b16 %v87
    %v249 = vunpack.c.l.b16 %v88
    %v250 = vunpack.c.h.b16 %v88
    %v251 = vunpack.c.l.b16 %v89
    %v252 = vunpack.c.h.b16 %v89
    %v253 = vunpack.c.l.b16 %v90
    %v254 = vunpack.c.h.b16 %v90
    %v255 = vunpack.c.l.b16 %v91
    %v256 = vunpack.c.h.b16 %v91
    %v257 = vunpack.c.l.b16 %v92
    %v258 = vunpack.c.h.b16 %v92
    %v259 = vunpack.c.l.b16 %v93
    %v260 = vunpack.c.h.b16 %v93
    %v261 = vunpack.c.l.b16 %v94
    %v262 = vunpack.c.h.b16 %v94
    %v263 = vunpack.c.l.b16 %v95
    %v264 = vunpack.c.h.b16 %v95
    %v265 = vunpack.c.l.b16 %v96
    %v266 = vunpack.c.h.b16 %v96
    %v267 = vunpack.c.l.b16 %v97
    %v268 = vunpack.c.h.b16 %v97
    %v269 = vunpack.c.l.b16 %v98
    %v270 = vunpack.c.h.b16 %v98
    %v271 = vunpack.c.l.b16 %v99
    %v272 = vunpack.c.h.b16 %v99
    %v273 = vunpack.c.l.b16 %v100
    %v274 = vunpack.c.h.b16 %v100
    %v275 = vunpack.c.l.b16 %v101
    %v276 = vunpack.c.h.b16 %v101
    %v277 = vunpack.c.l.b16 %v102
    %v278 = vunpack.c.h.b16 %v102
    %v279 = vunpack.c.l.b16 %v103
    %v280 = vunpack.c.h.b16 %v103
    %v281 = vunpack.c.l.b16 %v104
    %v282 = vunpack.c.h.b16 %v104
    %v283 = vunpack.c.l.b16 %v105
    %v284 = vunpack.c.h.b16 %v105
    %v285 = vunpack.c.l.b16 %v106
    %v286 = vunpack.c.h.b16 %v106
    %v287 = vunpack.c.l.b16 %v107
    %v288 = vunpack.c.h.b16 %v107
    %v289 = vunpack.c.l.b16 %v108
    %v290 = vunpack.c.h.b16 %v108
    %v291 = vunpack.c.l.b16 %v109
    %v292 = vunpack.c.h.b16 %v109
    %v293 = vunpack.c.l.b16 %v110
    %v294 = vunpack.c.h.b16 %v110
    %v295 = vunpack.c.l.b16 %v111
    %v296 = vunpack.c.h.b16 %v111
    %v297 = vunpack.c.l.b16 %v112
    %v298 = vunpack.c.h.b16 %v112
    %v299 = vunpack.c.l.b16 %v113
    %v300 = vunpack.c.h.b16 %v113
    %v301 = vunpack.c.l.b16 %v114
    %v302 = vunpack.c.h.b16 %v114
    %v303 = vunpack.c.l.b16 %v115
    %v304 = vunpack.c.h.b16 %v115
    %v305 = vunpack.c.l.b16 %v116
    %v306 = vunpack.c.h.b16 %v116
    %v307 = vunpack.c.l.b16 %v117
    %v308 = vunpack.c.h.b16 %v117
    %v309 = vunpack.c.l.b16 %v118
    %v310 = vunpack.c.h.b16 %v118
    %v311 = vunpack.c.l.b16 %v119
    %v312 = vunpack.c.h.b16 %v119
    %v313 = vunpack.c.l.b16 %v120
    %v314 = vunpack.c.h.b16 %v120
    %v315 = vunpack.c.l.b16 %v121
    %v316 = vunpack.c.h.b16 %v121
    %v317 = vunpack.c.l.b16 %v122
    %v318 = vunpack.c.h.b16 %v122
    %v319 = vunpack.c.l.b16 %v123
    %v320 = vunpack.c.h.b16 %v123
    %v321 = vunpack.c.l.b16 %v124
    %v322 = vunpack.c.h.b16 %v124
    %v323 = vpack.c.b16 %v203, %v195
    %v324 = vpack.c.b16 %v204, %v196
    %v325 = vpack.c.b16 %v205, %v197
    %v326 = vpack.c.b16 %v206, %v198
    %v327 = vpack.c.b16 %v207, %v199
    %v328 = vpack.c.b16 %v208, %v200
    %v329 = vpack.c.b16 %v209, %v201
    %v330 = vpack.c.b16 %v210, %v202
    %v331 = vpack.c.b16 %v219, %v211
    %v332 = vpack.c.b16 %v220, %v212
    %v333 = vpack.c.b16 %v221, %v213
    %v334 = vpack.c.b16 %v222, %v214
    %v335 = vpack.c.b16 %v223, %v215
    %v336 = vpack.c.b16 %v224, %v216
    %v337 = vpack.c.b16 %v225, %v217
    %v338 = vpack.c.b16 %v226, %v218
    %v339 = vpack.c.b16 %v235, %v227
    %v340 = vpack.c.b16 %v236, %v228
    %v341 = vpack.c.b16 %v237, %v229
    %v342 = vpack.c.b16 %v238, %v230
    %v343 = vpack.c.b16 %v239, %v231
    %v344 = vpack.c.b16 %v240, %v232
    %v345 = vpack.c.b16 %v241, %v233
    %v346 = vpack.c.b16 %v242, %v234
    %v347 = vpack.c.b16 %v251, %v243
    %v348 = vpack.c.b16 %v252, %v244
    %v349 = vpack.c.b16 %v253, %v245
    %v350 = vpack.c.b16 %v254, %v246
    %v351 = vpack.c.b16 %v255, %v247
    %v352 = vpack.c.b16 %v256, %v248
    %v353 = vpack.c.b16 %v257, %v249
    %v354 = vpack.c.b16 %v258, %v250
    %v355 = vpack.c.b16 %v267, %v259
    %v356 = vpack.c.b16 %v268, %v260
    %v357 = vpack.c.b16 %v269, %v261
    %v358 = vpack.c.b16 %v270, %v262
    %v359 = vpack.c.b16 %v271, %v263
    %v360 = vpack.c.b16 %v272, %v264
    %v361 = vpack.c.b16 %v273, %v265
    %v362 = vpack.c.b16 %v274, %v266
    %v363 = vpack.c.b16 %v283, %v275
    %v364 = vpack.c.b16 %v284, %v276
    %v365 = vpack.c.b16 %v285, %v277
    %v366 = vpack.c.b16 %v286, %v278
    %v367 = vpack.c.b16 %v287, %v279
    %v368 = vpack.c.b16 %v288, %v280
    %v369 = vpack.c.b16 %v289, %v281
    %v370 = vpack.c.b16 %v290, %v282
    %v371 = vpack.c.b16 %v299, %v291
    %v372 = vpack.c.b16 %v300, %v292
    %v373 = vpack.c.b16 %v301, %v293
    %v374 = vpack.c.b16 %v302, %v294
    %v375 = vpack.c.b16 %v303, %v295
    %v376 = vpack.c.b16 %v304, %v296
    %v377 = vpack.c.b16 %v305, %v297
    %v378 = vpack.c.b16 %v306, %v298
    %v379 = vpack.c.b16 %v315, %v307
    %v380 = vpack.c.b16 %v316, %v308
    %v381 = vpack.c.b16 %v317, %v309
    %v382 = vpack.c.b16 %v318, %v310
    %v383 = vpack.c.b16 %v319, %v311
    %v384 = vpack.c.b16 %v320, %v312
    %v385 = vpack.c.b16 %v321, %v313
    %v386 = vpack.c.b16 %v322, %v314
    %451 = vmatprep.subr.bf16.mxu0 %v380
    %452 = vmatpush1.bf16.msra.mxu0 %v379
    %453 = vmatprep.subr.bf16.mxu0 %v372
    %454 = vmatpush1.bf16.msra.mxu0 %v371
    %455 = vmatprep.subr.bf16.mxu0 %v364
    %456 = vmatpush1.bf16.msra.mxu0 %v363
    %457 = vmatprep.subr.bf16.mxu0 %v356
    %458 = vmatpush1.bf16.msra.mxu0 %v355
    %459 = vmatprep.subr.bf16.mxu0 %v348
    %460 = vmatpush1.bf16.msra.mxu0 %v347
    %461 = vmatprep.subr.bf16.mxu0 %v340
    %462 = vmatpush1.bf16.msra.mxu0 %v339
    %463 = vmatprep.subr.bf16.mxu0 %v332
    %464 = vmatpush1.bf16.msra.mxu0 %v331
    %465 = vmatprep.subr.bf16.mxu0 %v324
    %466 = vmatpush1.bf16.msra.mxu0 %v323
    %467 = vmatprep.subr.bf16.mxu0 0
    %468 = vmatpush2.bf16.msra.mxu0 0
    %469 = vmatprep.subr.bf16.mxu0 0
    %470 = vmatpush2.bf16.msra.mxu0 0
    %471 = vmatprep.subr.bf16.mxu0 0
    %472 = vmatpush2.bf16.msra.mxu0 0
    %473 = vmatprep.subr.bf16.mxu0 0
    %474 = vmatpush2.bf16.msra.mxu0 0
    %475 = vmatprep.subr.bf16.mxu0 0
    %476 = vmatpush2.bf16.msra.mxu0 0
    %477 = vmatprep.subr.bf16.mxu0 0
    %478 = vmatpush2.bf16.msra.mxu0 0
    %479 = vmatprep.subr.bf16.mxu0 0
    %480 = vmatpush2.bf16.msra.mxu0 0
    %481 = vmatprep.subr.bf16.mxu0 0
    %482 = vmatpush2.bf16.msra.mxu0 0
    %483 = vmatprep.mubr.bf16.mxu0 0
    %484 = vmatmul.mubr.bf16.gmra.mxu0 %v129
    %v485 = vpop.f32.mrf.mxu0
    %v486 = vadd.f32 0.0, %v485
    %v487 = vpop.f32.mrf.mxu0
    %v488 = vadd.f32 0.0, %v487
    %v489 = vpop.f32.mrf.mxu0
    %v490 = vadd.f32 0.0, %v489
    %v491 = vpop.f32.mrf.mxu0
    %v492 = vadd.f32 0.0, %v491
    %493 = vdwg.mxu0
    %494 = vmatprep.subr.bf16.mxu0 %v382
    %495 = vmatpush1.bf16.msra.mxu0 %v381
    %496 = vmatprep.subr.bf16.mxu0 %v374
    %497 = vmatpush1.bf16.msra.mxu0 %v373
    %498 = vmatprep.subr.bf16.mxu0 %v366
    %499 = vmatpush1.bf16.msra.mxu0 %v365
    %500 = vmatprep.subr.bf16.mxu0 %v358
    %501 = vmatpush1.bf16.msra.mxu0 %v357
    %502 = vmatprep.subr.bf16.mxu0 %v350
    %503 = vmatpush1.bf16.msra.mxu0 %v349
    %504 = vmatprep.subr.bf16.mxu0 %v342
    %505 = vmatpush1.bf16.msra.mxu0 %v341
    %506 = vmatprep.subr.bf16.mxu0 %v334
    %507 = vmatpush1.bf16.msra.mxu0 %v333
    %508 = vmatprep.subr.bf16.mxu0 %v326
    %509 = vmatpush1.bf16.msra.mxu0 %v325
    %510 = vmatprep.subr.bf16.mxu0 0
    %511 = vmatpush2.bf16.msra.mxu0 0
    %512 = vmatprep.subr.bf16.mxu0 0
    %513 = vmatpush2.bf16.msra.mxu0 0
    %514 = vmatprep.subr.bf16.mxu0 0
    %515 = vmatpush2.bf16.msra.mxu0 0
    %516 = vmatprep.subr.bf16.mxu0 0
    %517 = vmatpush2.bf16.msra.mxu0 0
    %518 = vmatprep.subr.bf16.mxu0 0
    %519 = vmatpush2.bf16.msra.mxu0 0
    %520 = vmatprep.subr.bf16.mxu0 0
    %521 = vmatpush2.bf16.msra.mxu0 0
    %522 = vmatprep.subr.bf16.mxu0 0
    %523 = vmatpush2.bf16.msra.mxu0 0
    %524 = vmatprep.subr.bf16.mxu0 0
    %525 = vmatpush2.bf16.msra.mxu0 0
    %526 = vmatprep.mubr.bf16.mxu0 0
    %527 = vmatmul.mubr.bf16.gmra.mxu0 %v129
    %v528 = vpop.f32.mrf.mxu0
    %v529 = vadd.f32 0.0, %v528
    %v530 = vpop.f32.mrf.mxu0
    %v531 = vadd.f32 0.0, %v530
    %v532 = vpop.f32.mrf.mxu0
    %v533 = vadd.f32 0.0, %v532
    %v534 = vpop.f32.mrf.mxu0
    %v535 = vadd.f32 0.0, %v534
    %536 = vdwg.mxu0
    %537 = vmatprep.subr.bf16.mxu0 %v384
    %538 = vmatpush1.bf16.msra.mxu0 %v383
    %539 = vmatprep.subr.bf16.mxu0 %v376
    %540 = vmatpush1.bf16.msra.mxu0 %v375
    %541 = vmatprep.subr.bf16.mxu0 %v368
    %542 = vmatpush1.bf16.msra.mxu0 %v367
    %543 = vmatprep.subr.bf16.mxu0 %v360
    %544 = vmatpush1.bf16.msra.mxu0 %v359
    %545 = vmatprep.subr.bf16.mxu0 %v352
    %546 = vmatpush1.bf16.msra.mxu0 %v351
    %547 = vmatprep.subr.bf16.mxu0 %v344
    %548 = vmatpush1.bf16.msra.mxu0 %v343
    %549 = vmatprep.subr.bf16.mxu0 %v336
    %550 = vmatpush1.bf16.msra.mxu0 %v335
    %551 = vmatprep.subr.bf16.mxu0 %v328
    %552 = vmatpush1.bf16.msra.mxu0 %v327
    %553 = vmatprep.subr.bf16.mxu0 0
    %554 = vmatpush2.bf16.msra.mxu0 0
    %555 = vmatprep.subr.bf16.mxu0 0
    %556 = vmatpush2.bf16.msra.mxu0 0
    %557 = vmatprep.subr.bf16.mxu0 0
    %558 = vmatpush2.bf16.msra.mxu0 0
    %559 = vmatprep.subr.bf16.mxu0 0
    %560 = vmatpush2.bf16.msra.mxu0 0
    %561 = vmatprep.subr.bf16.mxu0 0
    %562 = vmatpush2.bf16.msra.mxu0 0
    %563 = vmatprep.subr.bf16.mxu0 0
    %564 = vmatpush2.bf16.msra.mxu0 0
    %565 = vmatprep.subr.bf16.mxu0 0
    %566 = vmatpush2.bf16.msra.mxu0 0
    %567 = vmatprep.subr.bf16.mxu0 0
    %568 = vmatpush2.bf16.msra.mxu0 0
    %569 = vmatprep.mubr.bf16.mxu0 0
    %570 = vmatmul.mubr.bf16.gmra.mxu0 %v129
    %v571 = vpop.f32.mrf.mxu0
    %v572 = vadd.f32 0.0, %v571
    %v573 = vpop.f32.mrf.mxu0
    %v574 = vadd.f32 0.0, %v573
    %v575 = vpop.f32.mrf.mxu0
    %v576 = vadd.f32 0.0, %v575
    %v577 = vpop.f32.mrf.mxu0
    %v578 = vadd.f32 0.0, %v577
    %579 = vdwg.mxu0
    %580 = vmatprep.subr.bf16.mxu0 %v386
    %581 = vmatpush1.bf16.msra.mxu0 %v385
    %582 = vmatprep.subr.bf16.mxu0 %v378
    %583 = vmatpush1.bf16.msra.mxu0 %v377
    %584 = vmatprep.subr.bf16.mxu0 %v370
    %585 = vmatpush1.bf16.msra.mxu0 %v369
    %586 = vmatprep.subr.bf16.mxu0 %v362
    %587 = vmatpush1.bf16.msra.mxu0 %v361
    %588 = vmatprep.subr.bf16.mxu0 %v354
    %589 = vmatpush1.bf16.msra.mxu0 %v353
    %590 = vmatprep.subr.bf16.mxu0 %v346
    %591 = vmatpush1.bf16.msra.mxu0 %v345
    %592 = vmatprep.subr.bf16.mxu0 %v338
    %593 = vmatpush1.bf16.msra.mxu0 %v337
    %594 = vmatprep.subr.bf16.mxu0 %v330
    %595 = vmatpush1.bf16.msra.mxu0 %v329
    %596 = vmatprep.subr.bf16.mxu0 0
    %597 = vmatpush2.bf16.msra.mxu0 0
    %598 = vmatprep.subr.bf16.mxu0 0
    %599 = vmatpush2.bf16.msra.mxu0 0
    %600 = vmatprep.subr.bf16.mxu0 0
    %601 = vmatpush2.bf16.msra.mxu0 0
    %602 = vmatprep.subr.bf16.mxu0 0
    %603 = vmatpush2.bf16.msra.mxu0 0
    %604 = vmatprep.subr.bf16.mxu0 0
    %605 = vmatpush2.bf16.msra.mxu0 0
    %606 = vmatprep.subr.bf16.mxu0 0
    %607 = vmatpush2.bf16.msra.mxu0 0
    %608 = vmatprep.subr.bf16.mxu0 0
    %609 = vmatpush2.bf16.msra.mxu0 0
    %610 = vmatprep.subr.bf16.mxu0 0
    %611 = vmatpush2.bf16.msra.mxu0 0
    %612 = vmatprep.mubr.bf16.mxu0 0
    %613 = vmatmul.mubr.bf16.gmra.mxu0 %v129
    %v614 = vpop.f32.mrf.mxu0
    %v615 = vadd.f32 0.0, %v614
    %v616 = vpop.f32.mrf.mxu0
    %v617 = vadd.f32 0.0, %v616
    %v618 = vpop.f32.mrf.mxu0
    %v619 = vadd.f32 0.0, %v618
    %v620 = vpop.f32.mrf.mxu0
    %v621 = vadd.f32 0.0, %v620
    %622 = vdwg.mxu0
    %v623 = vmax.f32 %v486, 0.0
    %v624 = vmax.f32 %v488, 0.0
    %v625 = vmax.f32 %v529, 0.0
    %v626 = vmax.f32 %v531, 0.0
    %v627 = vmax.f32 %v572, 0.0
    %v628 = vmax.f32 %v574, 0.0
    %v629 = vmax.f32 %v615, 0.0
    %v630 = vmax.f32 %v617, 0.0
    %v631 = vmax.f32 %v490, 0.0
    %v632 = vmax.f32 %v492, 0.0
    %v633 = vmax.f32 %v533, 0.0
    %v634 = vmax.f32 %v535, 0.0
    %v635 = vmax.f32 %v576, 0.0
    %v636 = vmax.f32 %v578, 0.0
    %v637 = vmax.f32 %v619, 0.0
    %v638 = vmax.f32 %v621, 0.0
    %v639 = vpack.c.bf16 %v631, %v623
    %v640 = vpack.c.bf16 %v632, %v624
    %v641 = vpack.c.bf16 %v633, %v625
    %v642 = vpack.c.bf16 %v634, %v626
    %v643 = vpack.c.bf16 %v635, %v627
    %v644 = vpack.c.bf16 %v636, %v628
    %v645 = vpack.c.bf16 %v637, %v629
    %v646 = vpack.c.bf16 %v638, %v630
    %v647 = vld [vmem:[#allocation4] sm:$0xf]
    %v648 = vld [vmem:[#allocation4 + $0x4] sm:$0xf]
    %v649 = vld [vmem:[#allocation4 + $0x8] sm:$0xf]
    %v650 = vld [vmem:[#allocation4 + $0xc] sm:$0xf]
    %v651 = vld [vmem:[#allocation4 + $0x10] sm:$0xf]
    %v652 = vld [vmem:[#allocation4 + $0x14] sm:$0xf]
    %v653 = vld [vmem:[#allocation4 + $0x18] sm:$0xf]
    %v654 = vld [vmem:[#allocation4 + $0x1c] sm:$0xf]
    %v655 = vld [vmem:[#allocation4 + $0x20] sm:$0xf]
    %v656 = vld [vmem:[#allocation4 + $0x24] sm:$0xf]
    %v657 = vld [vmem:[#allocation4 + $0x28] sm:$0xf]
    %v658 = vld [vmem:[#allocation4 + $0x2c] sm:$0xf]
    %v659 = vld [vmem:[#allocation4 + $0x30] sm:$0xf]
    %v660 = vld [vmem:[#allocation4 + $0x34] sm:$0xf]
    %v661 = vld [vmem:[#allocation4 + $0x38] sm:$0xf]
    %v662 = vld [vmem:[#allocation4 + $0x3c] sm:$0xf]
    %v663 = vld [vmem:[#allocation4 + $0x40] sm:$0xf]
    %v664 = vld [vmem:[#allocation4 + $0x44] sm:$0xf]
    %v665 = vld [vmem:[#allocation4 + $0x48] sm:$0xf]
    %v666 = vld [vmem:[#allocation4 + $0x4c] sm:$0xf]
    %v667 = vld [vmem:[#allocation4 + $0x50] sm:$0xf]
    %v668 = vld [vmem:[#allocation4 + $0x54] sm:$0xf]
    %v669 = vld [vmem:[#allocation4 + $0x58] sm:$0xf]
    %v670 = vld [vmem:[#allocation4 + $0x5c] sm:$0xf]
    %v671 = vld [vmem:[#allocation4 + $0x60] sm:$0xf]
    %v672 = vld [vmem:[#allocation4 + $0x64] sm:$0xf]
    %v673 = vld [vmem:[#allocation4 + $0x68] sm:$0xf]
    %v674 = vld [vmem:[#allocation4 + $0x6c] sm:$0xf]
    %v675 = vld [vmem:[#allocation4 + $0x70] sm:$0xf]
    %v676 = vld [vmem:[#allocation4 + $0x74] sm:$0xf]
    %v677 = vld [vmem:[#allocation4 + $0x78] sm:$0xf]
    %v678 = vld [vmem:[#allocation4 + $0x7c] sm:$0xf]
    %v679 = vld [vmem:[#allocation4 + $0x80] sm:$0xf]
    %v680 = vld [vmem:[#allocation4 + $0x84] sm:$0xf]
    %v681 = vld [vmem:[#allocation4 + $0x88] sm:$0xf]
    %v682 = vld [vmem:[#allocation4 + $0x8c] sm:$0xf]
    %v683 = vld [vmem:[#allocation4 + $0x90] sm:$0xf]
    %v684 = vld [vmem:[#allocation4 + $0x94] sm:$0xf]
    %v685 = vld [vmem:[#allocation4 + $0x98] sm:$0xf]
    %v686 = vld [vmem:[#allocation4 + $0x9c] sm:$0xf]
    %v687 = vld [vmem:[#allocation4 + $0xa0] sm:$0xf]
    %v688 = vld [vmem:[#allocation4 + $0xa4] sm:$0xf]
    %v689 = vld [vmem:[#allocation4 + $0xa8] sm:$0xf]
    %v690 = vld [vmem:[#allocation4 + $0xac] sm:$0xf]
    %v691 = vld [vmem:[#allocation4 + $0xb0] sm:$0xf]
    %v692 = vld [vmem:[#allocation4 + $0xb4] sm:$0xf]
    %v693 = vld [vmem:[#allocation4 + $0xb8] sm:$0xf]
    %v694 = vld [vmem:[#allocation4 + $0xbc] sm:$0xf]
    %v695 = vld [vmem:[#allocation4 + $0xc0] sm:$0xf]
    %v696 = vld [vmem:[#allocation4 + $0xc4] sm:$0xf]
    %v697 = vld [vmem:[#allocation4 + $0xc8] sm:$0xf]
    %v698 = vld [vmem:[#allocation4 + $0xcc] sm:$0xf]
    %v699 = vld [vmem:[#allocation4 + $0xd0] sm:$0xf]
    %v700 = vld [vmem:[#allocation4 + $0xd4] sm:$0xf]
    %v701 = vld [vmem:[#allocation4 + $0xd8] sm:$0xf]
    %v702 = vld [vmem:[#allocation4 + $0xdc] sm:$0xf]
    %v703 = vld [vmem:[#allocation4 + $0xe0] sm:$0xf]
    %v704 = vld [vmem:[#allocation4 + $0xe4] sm:$0xf]
    %v705 = vld [vmem:[#allocation4 + $0xe8] sm:$0xf]
    %v706 = vld [vmem:[#allocation4 + $0xec] sm:$0xf]
    %v707 = vld [vmem:[#allocation4 + $0xf0] sm:$0xf]
    %v708 = vld [vmem:[#allocation4 + $0xf4] sm:$0xf]
    %v709 = vld [vmem:[#allocation4 + $0xf8] sm:$0xf]
    %v710 = vld [vmem:[#allocation4 + $0xfc] sm:$0xf]
    %v711 = vld [vmem:[#allocation4 + $0x100] sm:$0xf]
    %v712 = vld [vmem:[#allocation4 + $0x104] sm:$0xf]
    %v713 = vld [vmem:[#allocation4 + $0x108] sm:$0xf]
    %v714 = vld [vmem:[#allocation4 + $0x10c] sm:$0xf]
    %v715 = vld [vmem:[#allocation4 + $0x110] sm:$0xf]
    %v716 = vld [vmem:[#allocation4 + $0x114] sm:$0xf]
    %v717 = vld [vmem:[#allocation4 + $0x118] sm:$0xf]
    %v718 = vld [vmem:[#allocation4 + $0x11c] sm:$0xf]
    %v719 = vld [vmem:[#allocation4 + $0x120] sm:$0xf]
    %v720 = vld [vmem:[#allocation4 + $0x124] sm:$0xf]
    %v721 = vld [vmem:[#allocation4 + $0x128] sm:$0xf]
    %v722 = vld [vmem:[#allocation4 + $0x12c] sm:$0xf]
    %v723 = vld [vmem:[#allocation4 + $0x130] sm:$0xf]
    %v724 = vld [vmem:[#allocation4 + $0x134] sm:$0xf]
    %v725 = vld [vmem:[#allocation4 + $0x138] sm:$0xf]
    %v726 = vld [vmem:[#allocation4 + $0x13c] sm:$0xf]
    %v727 = vld [vmem:[#allocation4 + $0x140] sm:$0xf]
    %v728 = vld [vmem:[#allocation4 + $0x144] sm:$0xf]
    %v729 = vld [vmem:[#allocation4 + $0x148] sm:$0xf]
    %v730 = vld [vmem:[#allocation4 + $0x14c] sm:$0xf]
    %v731 = vld [vmem:[#allocation4 + $0x150] sm:$0xf]
    %v732 = vld [vmem:[#allocation4 + $0x154] sm:$0xf]
    %v733 = vld [vmem:[#allocation4 + $0x158] sm:$0xf]
    %v734 = vld [vmem:[#allocation4 + $0x15c] sm:$0xf]
    %v735 = vld [vmem:[#allocation4 + $0x160] sm:$0xf]
    %v736 = vld [vmem:[#allocation4 + $0x164] sm:$0xf]
    %v737 = vld [vmem:[#allocation4 + $0x168] sm:$0xf]
    %v738 = vld [vmem:[#allocation4 + $0x16c] sm:$0xf]
    %v739 = vld [vmem:[#allocation4 + $0x170] sm:$0xf]
    %v740 = vld [vmem:[#allocation4 + $0x174] sm:$0xf]
    %v741 = vld [vmem:[#allocation4 + $0x178] sm:$0xf]
    %v742 = vld [vmem:[#allocation4 + $0x17c] sm:$0xf]
    %v743 = vld [vmem:[#allocation4 + $0x180] sm:$0xf]
    %v744 = vld [vmem:[#allocation4 + $0x184] sm:$0xf]
    %v745 = vld [vmem:[#allocation4 + $0x188] sm:$0xf]
    %v746 = vld [vmem:[#allocation4 + $0x18c] sm:$0xf]
    %v747 = vld [vmem:[#allocation4 + $0x190] sm:$0xf]
    %v748 = vld [vmem:[#allocation4 + $0x194] sm:$0xf]
    %v749 = vld [vmem:[#allocation4 + $0x198] sm:$0xf]
    %v750 = vld [vmem:[#allocation4 + $0x19c] sm:$0xf]
    %v751 = vld [vmem:[#allocation4 + $0x1a0] sm:$0xf]
    %v752 = vld [vmem:[#allocation4 + $0x1a4] sm:$0xf]
    %v753 = vld [vmem:[#allocation4 + $0x1a8] sm:$0xf]
    %v754 = vld [vmem:[#allocation4 + $0x1ac] sm:$0xf]
    %v755 = vld [vmem:[#allocation4 + $0x1b0] sm:$0xf]
    %v756 = vld [vmem:[#allocation4 + $0x1b4] sm:$0xf]
    %v757 = vld [vmem:[#allocation4 + $0x1b8] sm:$0xf]
    %v758 = vld [vmem:[#allocation4 + $0x1bc] sm:$0xf]
    %v759 = vld [vmem:[#allocation4 + $0x1c0] sm:$0xf]
    %v760 = vld [vmem:[#allocation4 + $0x1c4] sm:$0xf]
    %v761 = vld [vmem:[#allocation4 + $0x1c8] sm:$0xf]
    %v762 = vld [vmem:[#allocation4 + $0x1cc] sm:$0xf]
    %v763 = vld [vmem:[#allocation4 + $0x1d0] sm:$0xf]
    %v764 = vld [vmem:[#allocation4 + $0x1d4] sm:$0xf]
    %v765 = vld [vmem:[#allocation4 + $0x1d8] sm:$0xf]
    %v766 = vld [vmem:[#allocation4 + $0x1dc] sm:$0xf]
    %v767 = vld [vmem:[#allocation4 + $0x1e0] sm:$0xf]
    %v768 = vld [vmem:[#allocation4 + $0x1e4] sm:$0xf]
    %v769 = vld [vmem:[#allocation4 + $0x1e8] sm:$0xf]
    %v770 = vld [vmem:[#allocation4 + $0x1ec] sm:$0xf]
    %v771 = vld [vmem:[#allocation4 + $0x1f0] sm:$0xf]
    %v772 = vld [vmem:[#allocation4 + $0x1f4] sm:$0xf]
    %v773 = vld [vmem:[#allocation4 + $0x1f8] sm:$0xf]
    %v774 = vld [vmem:[#allocation4 + $0x1fc] sm:$0xf]
    %v903 = vunpack.c.l.b16 %v647
    %v904 = vunpack.c.l.b16 %v648
    %v905 = vunpack.c.l.b16 %v649
    %v906 = vunpack.c.l.b16 %v650
    %v907 = vunpack.c.l.b16 %v651
    %v908 = vunpack.c.l.b16 %v652
    %v909 = vunpack.c.l.b16 %v653
    %v910 = vunpack.c.l.b16 %v654
    %v911 = vunpack.c.l.b16 %v655
    %v912 = vunpack.c.l.b16 %v656
    %v913 = vunpack.c.l.b16 %v657
    %v914 = vunpack.c.l.b16 %v658
    %v915 = vunpack.c.l.b16 %v659
    %v916 = vunpack.c.l.b16 %v660
    %v917 = vunpack.c.l.b16 %v661
    %v918 = vunpack.c.l.b16 %v662
    %v919 = vunpack.c.l.b16 %v663
    %v920 = vunpack.c.l.b16 %v664
    %v921 = vunpack.c.l.b16 %v665
    %v922 = vunpack.c.l.b16 %v666
    %v923 = vunpack.c.l.b16 %v667
    %v924 = vunpack.c.l.b16 %v668
    %v925 = vunpack.c.l.b16 %v669
    %v926 = vunpack.c.l.b16 %v670
    %v927 = vunpack.c.l.b16 %v671
    %v928 = vunpack.c.l.b16 %v672
    %v929 = vunpack.c.l.b16 %v673
    %v930 = vunpack.c.l.b16 %v674
    %v931 = vunpack.c.l.b16 %v675
    %v932 = vunpack.c.l.b16 %v676
    %v933 = vunpack.c.l.b16 %v677
    %v934 = vunpack.c.l.b16 %v678
    %v935 = vunpack.c.l.b16 %v679
    %v936 = vunpack.c.l.b16 %v680
    %v937 = vunpack.c.l.b16 %v681
    %v938 = vunpack.c.l.b16 %v682
    %v939 = vunpack.c.l.b16 %v683
    %v940 = vunpack.c.l.b16 %v684
    %v941 = vunpack.c.l.b16 %v685
    %v942 = vunpack.c.l.b16 %v686
    %v943 = vunpack.c.l.b16 %v687
    %v944 = vunpack.c.l.b16 %v688
    %v945 = vunpack.c.l.b16 %v689
    %v946 = vunpack.c.l.b16 %v690
    %v947 = vunpack.c.l.b16 %v691
    %v948 = vunpack.c.l.b16 %v692
    %v949 = vunpack.c.l.b16 %v693
    %v950 = vunpack.c.l.b16 %v694
    %v951 = vunpack.c.l.b16 %v695
    %v952 = vunpack.c.l.b16 %v696
    %v953 = vunpack.c.l.b16 %v697
    %v954 = vunpack.c.l.b16 %v698
    %v955 = vunpack.c.l.b16 %v699
    %v956 = vunpack.c.l.b16 %v700
    %v957 = vunpack.c.l.b16 %v701
    %v958 = vunpack.c.l.b16 %v702
    %v959 = vunpack.c.l.b16 %v703
    %v960 = vunpack.c.l.b16 %v704
    %v961 = vunpack.c.l.b16 %v705
    %v962 = vunpack.c.l.b16 %v706
    %v963 = vunpack.c.l.b16 %v707
    %v964 = vunpack.c.l.b16 %v708
    %v965 = vunpack.c.l.b16 %v709
    %v966 = vunpack.c.l.b16 %v710
    %v967 = vunpack.c.l.b16 %v711
    %v968 = vunpack.c.l.b16 %v712
    %v969 = vunpack.c.l.b16 %v713
    %v970 = vunpack.c.l.b16 %v714
    %v971 = vunpack.c.l.b16 %v715
    %v972 = vunpack.c.l.b16 %v716
    %v973 = vunpack.c.l.b16 %v717
    %v974 = vunpack.c.l.b16 %v718
    %v975 = vunpack.c.l.b16 %v719
    %v976 = vunpack.c.l.b16 %v720
    %v977 = vunpack.c.l.b16 %v721
    %v978 = vunpack.c.l.b16 %v722
    %v979 = vunpack.c.l.b16 %v723
    %v980 = vunpack.c.l.b16 %v724
    %v981 = vunpack.c.l.b16 %v725
    %v982 = vunpack.c.l.b16 %v726
    %v983 = vunpack.c.l.b16 %v727
    %v984 = vunpack.c.l.b16 %v728
    %v985 = vunpack.c.l.b16 %v729
    %v986 = vunpack.c.l.b16 %v730
    %v987 = vunpack.c.l.b16 %v731
    %v988 = vunpack.c.l.b16 %v732
    %v989 = vunpack.c.l.b16 %v733
    %v990 = vunpack.c.l.b16 %v734
    %v991 = vunpack.c.l.b16 %v735
    %v992 = vunpack.c.l.b16 %v736
    %v993 = vunpack.c.l.b16 %v737
    %v994 = vunpack.c.l.b16 %v738
    %v995 = vunpack.c.l.b16 %v739
    %v996 = vunpack.c.l.b16 %v740
    %v997 = vunpack.c.l.b16 %v741
    %v998 = vunpack.c.l.b16 %v742
    %v999 = vunpack.c.l.b16 %v743
    %v1000 = vunpack.c.l.b16 %v744
    %v1001 = vunpack.c.l.b16 %v745
    %v1002 = vunpack.c.l.b16 %v746
    %v1003 = vunpack.c.l.b16 %v747
    %v1004 = vunpack.c.l.b16 %v748
    %v1005 = vunpack.c.l.b16 %v749
    %v1006 = vunpack.c.l.b16 %v750
    %v1007 = vunpack.c.l.b16 %v751
    %v1008 = vunpack.c.l.b16 %v752
    %v1009 = vunpack.c.l.b16 %v753
    %v1010 = vunpack.c.l.b16 %v754
    %v1011 = vunpack.c.l.b16 %v755
    %v1012 = vunpack.c.l.b16 %v756
    %v1013 = vunpack.c.l.b16 %v757
    %v1014 = vunpack.c.l.b16 %v758
    %v1015 = vunpack.c.l.b16 %v759
    %v1016 = vunpack.c.l.b16 %v760
    %v1017 = vunpack.c.l.b16 %v761
    %v1018 = vunpack.c.l.b16 %v762
    %v1019 = vunpack.c.l.b16 %v763
    %v1020 = vunpack.c.l.b16 %v764
    %v1021 = vunpack.c.l.b16 %v765
    %v1022 = vunpack.c.l.b16 %v766
    %v1023 = vunpack.c.l.b16 %v767
    %v1024 = vunpack.c.l.b16 %v768
    %v1025 = vunpack.c.l.b16 %v769
    %v1026 = vunpack.c.l.b16 %v770
    %v1027 = vunpack.c.l.b16 %v771
    %v1028 = vunpack.c.l.b16 %v772
    %v1029 = vunpack.c.l.b16 %v773
    %v1030 = vunpack.c.l.b16 %v774
    %v1031 = vpack.c.b16 %v904, %v903
    %v1032 = vpack.c.b16 %v906, %v905
    %v1033 = vpack.c.b16 %v908, %v907
    %v1034 = vpack.c.b16 %v910, %v909
    %v1035 = vpack.c.b16 %v912, %v911
    %v1036 = vpack.c.b16 %v914, %v913
    %v1037 = vpack.c.b16 %v916, %v915
    %v1038 = vpack.c.b16 %v918, %v917
    %v1039 = vpack.c.b16 %v920, %v919
    %v1040 = vpack.c.b16 %v922, %v921
    %v1041 = vpack.c.b16 %v924, %v923
    %v1042 = vpack.c.b16 %v926, %v925
    %v1043 = vpack.c.b16 %v928, %v927
    %v1044 = vpack.c.b16 %v930, %v929
    %v1045 = vpack.c.b16 %v932, %v931
    %v1046 = vpack.c.b16 %v934, %v933
    %v1047 = vpack.c.b16 %v936, %v935
    %v1048 = vpack.c.b16 %v938, %v937
    %v1049 = vpack.c.b16 %v940, %v939
    %v1050 = vpack.c.b16 %v942, %v941
    %v1051 = vpack.c.b16 %v944, %v943
    %v1052 = vpack.c.b16 %v946, %v945
    %v1053 = vpack.c.b16 %v948, %v947
    %v1054 = vpack.c.b16 %v950, %v949
    %v1055 = vpack.c.b16 %v952, %v951
    %v1056 = vpack.c.b16 %v954, %v953
    %v1057 = vpack.c.b16 %v956, %v955
    %v1058 = vpack.c.b16 %v958, %v957
    %v1059 = vpack.c.b16 %v960, %v959
    %v1060 = vpack.c.b16 %v962, %v961
    %v1061 = vpack.c.b16 %v964, %v963
    %v1062 = vpack.c.b16 %v966, %v965
    %v1063 = vpack.c.b16 %v968, %v967
    %v1064 = vpack.c.b16 %v970, %v969
    %v1065 = vpack.c.b16 %v972, %v971
    %v1066 = vpack.c.b16 %v974, %v973
    %v1067 = vpack.c.b16 %v976, %v975
    %v1068 = vpack.c.b16 %v978, %v977
    %v1069 = vpack.c.b16 %v980, %v979
    %v1070 = vpack.c.b16 %v982, %v981
    %v1071 = vpack.c.b16 %v984, %v983
    %v1072 = vpack.c.b16 %v986, %v985
    %v1073 = vpack.c.b16 %v988, %v987
    %v1074 = vpack.c.b16 %v990, %v989
    %v1075 = vpack.c.b16 %v992, %v991
    %v1076 = vpack.c.b16 %v994, %v993
    %v1077 = vpack.c.b16 %v996, %v995
    %v1078 = vpack.c.b16 %v998, %v997
    %v1079 = vpack.c.b16 %v1000, %v999
    %v1080 = vpack.c.b16 %v1002, %v1001
    %v1081 = vpack.c.b16 %v1004, %v1003
    %v1082 = vpack.c.b16 %v1006, %v1005
    %v1083 = vpack.c.b16 %v1008, %v1007
    %v1084 = vpack.c.b16 %v1010, %v1009
    %v1085 = vpack.c.b16 %v1012, %v1011
    %v1086 = vpack.c.b16 %v1014, %v1013
    %v1087 = vpack.c.b16 %v1016, %v1015
    %v1088 = vpack.c.b16 %v1018, %v1017
    %v1089 = vpack.c.b16 %v1020, %v1019
    %v1090 = vpack.c.b16 %v1022, %v1021
    %v1091 = vpack.c.b16 %v1024, %v1023
    %v1092 = vpack.c.b16 %v1026, %v1025
    %v1093 = vpack.c.b16 %v1028, %v1027
    %v1094 = vpack.c.b16 %v1030, %v1029
    %1159 = vmatprep.subr.bf16.mxu0 0
    %1160 = vmatpush1.bf16.msra.mxu0 %v1038
    %1161 = vmatprep.subr.bf16.mxu0 0
    %1162 = vmatpush1.bf16.msra.mxu0 %v1037
    %1163 = vmatprep.subr.bf16.mxu0 0
    %1164 = vmatpush1.bf16.msra.mxu0 %v1036
    %1165 = vmatprep.subr.bf16.mxu0 0
    %1166 = vmatpush1.bf16.msra.mxu0 %v1035
    %1167 = vmatprep.subr.bf16.mxu0 0
    %1168 = vmatpush1.bf16.msra.mxu0 %v1034
    %1169 = vmatprep.subr.bf16.mxu0 0
    %1170 = vmatpush1.bf16.msra.mxu0 %v1033
    %1171 = vmatprep.subr.bf16.mxu0 0
    %1172 = vmatpush1.bf16.msra.mxu0 %v1032
    %1173 = vmatprep.subr.bf16.mxu0 0
    %1174 = vmatpush1.bf16.msra.mxu0 %v1031
    %1175 = vmatprep.subr.bf16.mxu0 0
    %1176 = vmatpush2.bf16.msra.mxu0 %v1046
    %1177 = vmatprep.subr.bf16.mxu0 0
    %1178 = vmatpush2.bf16.msra.mxu0 %v1045
    %1179 = vmatprep.subr.bf16.mxu0 0
    %1180 = vmatpush2.bf16.msra.mxu0 %v1044
    %1181 = vmatprep.subr.bf16.mxu0 0
    %1182 = vmatpush2.bf16.msra.mxu0 %v1043
    %1183 = vmatprep.subr.bf16.mxu0 0
    %1184 = vmatpush2.bf16.msra.mxu0 %v1042
    %1185 = vmatprep.subr.bf16.mxu0 0
    %1186 = vmatpush2.bf16.msra.mxu0 %v1041
    %1187 = vmatprep.subr.bf16.mxu0 0
    %1188 = vmatpush2.bf16.msra.mxu0 %v1040
    %1189 = vmatprep.subr.bf16.mxu0 0
    %1190 = vmatpush2.bf16.msra.mxu0 %v1039
    %1191 = vmatprep.mubr.bf16.mxu0 %v640
    %1192 = vmatmul.mubr.bf16.gmra.mxu0 %v639
    %v1193 = vpop.f32.mrf.mxu0
    %v1194 = vadd.f32 0.0, %v1193
    %v1195 = vpop.f32.mrf.mxu0
    %v1196 = vpop.f32.mrf.mxu0
    %v1197 = vadd.f32 0.0, %v1196
    %v1198 = vpop.f32.mrf.mxu0
    %1199 = vdwg.mxu0
    %1200 = vmatprep.subr.bf16.mxu0 0
    %1201 = vmatpush1.bf16.msra.mxu0 %v1054
    %1202 = vmatprep.subr.bf16.mxu0 0
    %1203 = vmatpush1.bf16.msra.mxu0 %v1053
    %1204 = vmatprep.subr.bf16.mxu0 0
    %1205 = vmatpush1.bf16.msra.mxu0 %v1052
    %1206 = vmatprep.subr.bf16.mxu0 0
    %1207 = vmatpush1.bf16.msra.mxu0 %v1051
    %1208 = vmatprep.subr.bf16.mxu0 0
    %1209 = vmatpush1.bf16.msra.mxu0 %v1050
    %1210 = vmatprep.subr.bf16.mxu0 0
    %1211 = vmatpush1.bf16.msra.mxu0 %v1049
    %1212 = vmatprep.subr.bf16.mxu0 0
    %1213 = vmatpush1.bf16.msra.mxu0 %v1048
    %1214 = vmatprep.subr.bf16.mxu0 0
    %1215 = vmatpush1.bf16.msra.mxu0 %v1047
    %1216 = vmatprep.subr.bf16.mxu0 0
    %1217 = vmatpush2.bf16.msra.mxu0 %v1062
    %1218 = vmatprep.subr.bf16.mxu0 0
    %1219 = vmatpush2.bf16.msra.mxu0 %v1061
    %1220 = vmatprep.subr.bf16.mxu0 0
    %1221 = vmatpush2.bf16.msra.mxu0 %v1060
    %1222 = vmatprep.subr.bf16.mxu0 0
    %1223 = vmatpush2.bf16.msra.mxu0 %v1059
    %1224 = vmatprep.subr.bf16.mxu0 0
    %1225 = vmatpush2.bf16.msra.mxu0 %v1058
    %1226 = vmatprep.subr.bf16.mxu0 0
    %1227 = vmatpush2.bf16.msra.mxu0 %v1057
    %1228 = vmatprep.subr.bf16.mxu0 0
    %1229 = vmatpush2.bf16.msra.mxu0 %v1056
    %1230 = vmatprep.subr.bf16.mxu0 0
    %1231 = vmatpush2.bf16.msra.mxu0 %v1055
    %1232 = vmatprep.mubr.bf16.mxu0 %v642
    %1233 = vmatmul.mubr.bf16.gmra.mxu0 %v641
    %v1234 = vpop.f32.mrf.mxu0
    %v1235 = vadd.f32 %v1194, %v1234
    %v1236 = vpop.f32.mrf.mxu0
    %v1237 = vpop.f32.mrf.mxu0
    %v1238 = vadd.f32 %v1197, %v1237
    %v1239 = vpop.f32.mrf.mxu0
    %1240 = vdwg.mxu0
    %1241 = vmatprep.subr.bf16.mxu0 0
    %1242 = vmatpush1.bf16.msra.mxu0 %v1070
    %1243 = vmatprep.subr.bf16.mxu0 0
    %1244 = vmatpush1.bf16.msra.mxu0 %v1069
    %1245 = vmatprep.subr.bf16.mxu0 0
    %1246 = vmatpush1.bf16.msra.mxu0 %v1068
    %1247 = vmatprep.subr.bf16.mxu0 0
    %1248 = vmatpush1.bf16.msra.mxu0 %v1067
    %1249 = vmatprep.subr.bf16.mxu0 0
    %1250 = vmatpush1.bf16.msra.mxu0 %v1066
    %1251 = vmatprep.subr.bf16.mxu0 0
    %1252 = vmatpush1.bf16.msra.mxu0 %v1065
    %1253 = vmatprep.subr.bf16.mxu0 0
    %1254 = vmatpush1.bf16.msra.mxu0 %v1064
    %1255 = vmatprep.subr.bf16.mxu0 0
    %1256 = vmatpush1.bf16.msra.mxu0 %v1063
    %1257 = vmatprep.subr.bf16.mxu0 0
    %1258 = vmatpush2.bf16.msra.mxu0 %v1078
    %1259 = vmatprep.subr.bf16.mxu0 0
    %1260 = vmatpush2.bf16.msra.mxu0 %v1077
    %1261 = vmatprep.subr.bf16.mxu0 0
    %1262 = vmatpush2.bf16.msra.mxu0 %v1076
    %1263 = vmatprep.subr.bf16.mxu0 0
    %1264 = vmatpush2.bf16.msra.mxu0 %v1075
    %1265 = vmatprep.subr.bf16.mxu0 0
    %1266 = vmatpush2.bf16.msra.mxu0 %v1074
    %1267 = vmatprep.subr.bf16.mxu0 0
    %1268 = vmatpush2.bf16.msra.mxu0 %v1073
    %1269 = vmatprep.subr.bf16.mxu0 0
    %1270 = vmatpush2.bf16.msra.mxu0 %v1072
    %1271 = vmatprep.subr.bf16.mxu0 0
    %1272 = vmatpush2.bf16.msra.mxu0 %v1071
    %1273 = vmatprep.mubr.bf16.mxu0 %v644
    %1274 = vmatmul.mubr.bf16.gmra.mxu0 %v643
    %v1275 = vpop.f32.mrf.mxu0
    %v1276 = vadd.f32 %v1235, %v1275
    %v1277 = vpop.f32.mrf.mxu0
    %v1278 = vpop.f32.mrf.mxu0
    %v1279 = vadd.f32 %v1238, %v1278
    %v1280 = vpop.f32.mrf.mxu0
    %1281 = vdwg.mxu0
    %1282 = vmatprep.subr.bf16.mxu0 0
    %1283 = vmatpush1.bf16.msra.mxu0 %v1086
    %1284 = vmatprep.subr.bf16.mxu0 0
    %1285 = vmatpush1.bf16.msra.mxu0 %v1085
    %1286 = vmatprep.subr.bf16.mxu0 0
    %1287 = vmatpush1.bf16.msra.mxu0 %v1084
    %1288 = vmatprep.subr.bf16.mxu0 0
    %1289 = vmatpush1.bf16.msra.mxu0 %v1083
    %1290 = vmatprep.subr.bf16.mxu0 0
    %1291 = vmatpush1.bf16.msra.mxu0 %v1082
    %1292 = vmatprep.subr.bf16.mxu0 0
    %1293 = vmatpush1.bf16.msra.mxu0 %v1081
    %1294 = vmatprep.subr.bf16.mxu0 0
    %1295 = vmatpush1.bf16.msra.mxu0 %v1080
    %1296 = vmatprep.subr.bf16.mxu0 0
    %1297 = vmatpush1.bf16.msra.mxu0 %v1079
    %1298 = vmatprep.subr.bf16.mxu0 0
    %1299 = vmatpush2.bf16.msra.mxu0 %v1094
    %1300 = vmatprep.subr.bf16.mxu0 0
    %1301 = vmatpush2.bf16.msra.mxu0 %v1093
    %1302 = vmatprep.subr.bf16.mxu0 0
    %1303 = vmatpush2.bf16.msra.mxu0 %v1092
    %1304 = vmatprep.subr.bf16.mxu0 0
    %1305 = vmatpush2.bf16.msra.mxu0 %v1091
    %1306 = vmatprep.subr.bf16.mxu0 0
    %1307 = vmatpush2.bf16.msra.mxu0 %v1090
    %1308 = vmatprep.subr.bf16.mxu0 0
    %1309 = vmatpush2.bf16.msra.mxu0 %v1089
    %1310 = vmatprep.subr.bf16.mxu0 0
    %1311 = vmatpush2.bf16.msra.mxu0 %v1088
    %1312 = vmatprep.subr.bf16.mxu0 0
    %1313 = vmatpush2.bf16.msra.mxu0 %v1087
    %1314 = vmatprep.mubr.bf16.mxu0 %v646
    %1315 = vmatmul.mubr.bf16.gmra.mxu0 %v645
    %v1316 = vpop.f32.mrf.mxu0
    %v1317 = vadd.f32 %v1276, %v1316
    %v1318 = vpop.f32.mrf.mxu0
    %v1319 = vpop.f32.mrf.mxu0
    %v1320 = vadd.f32 %v1279, %v1319
    %v1321 = vpop.f32.mrf.mxu0
    %1322 = vdwg.mxu0
    %v1323 = vmax.f32 %v1317, 0.0
    %v1324 = vmax.f32 %v1320, 0.0
    %v1325 = vpack.c.bf16 %v1324, %v1323
    %v1326 = vld [vmem:[#allocation6] sm:$0xf]
    %v1327 = vld [vmem:[#allocation6 + $0x4] sm:$0xf]
    %v1328 = vld [vmem:[#allocation6 + $0x8] sm:$0xf]
    %v1329 = vld [vmem:[#allocation6 + $0xc] sm:$0xf]
    %v1330 = vld [vmem:[#allocation6 + $0x10] sm:$0xf]
    %v1331 = vld [vmem:[#allocation6 + $0x14] sm:$0xf]
    %v1332 = vld [vmem:[#allocation6 + $0x18] sm:$0xf]
    %v1333 = vld [vmem:[#allocation6 + $0x1c] sm:$0xf]
    %v1334 = vld [vmem:[#allocation6 + $0x20] sm:$0xf]
    %v1335 = vld [vmem:[#allocation6 + $0x24] sm:$0xf]
    %v1336 = vld [vmem:[#allocation6 + $0x28] sm:$0xf]
    %v1337 = vld [vmem:[#allocation6 + $0x2c] sm:$0xf]
    %v1338 = vld [vmem:[#allocation6 + $0x30] sm:$0xf]
    %v1339 = vld [vmem:[#allocation6 + $0x34] sm:$0xf]
    %v1340 = vld [vmem:[#allocation6 + $0x38] sm:$0xf]
    %v1341 = vld [vmem:[#allocation6 + $0x3c] sm:$0xf]
    %v1358 = vunpack.c.l.b16 %v1326
    %v1359 = vunpack.c.l.b16 %v1327
    %v1360 = vunpack.c.l.b16 %v1328
    %v1361 = vunpack.c.l.b16 %v1329
    %v1362 = vunpack.c.l.b16 %v1330
    %v1363 = vunpack.c.l.b16 %v1331
    %v1364 = vunpack.c.l.b16 %v1332
    %v1365 = vunpack.c.l.b16 %v1333
    %v1366 = vunpack.c.l.b16 %v1334
    %v1367 = vunpack.c.l.b16 %v1335
    %v1368 = vunpack.c.l.b16 %v1336
    %v1369 = vunpack.c.l.b16 %v1337
    %v1370 = vunpack.c.l.b16 %v1338
    %v1371 = vunpack.c.l.b16 %v1339
    %v1372 = vunpack.c.l.b16 %v1340
    %v1373 = vunpack.c.l.b16 %v1341
    %v1374 = vpack.c.b16 %v1359, %v1358
    %v1375 = vpack.c.b16 %v1361, %v1360
    %v1376 = vpack.c.b16 %v1363, %v1362
    %v1377 = vpack.c.b16 %v1365, %v1364
    %v1378 = vpack.c.b16 %v1367, %v1366
    %v1379 = vpack.c.b16 %v1369, %v1368
    %v1380 = vpack.c.b16 %v1371, %v1370
    %v1381 = vpack.c.b16 %v1373, %v1372
    %1390 = vmatprep.subr.bf16.mxu0 0
    %1391 = vmatpush1.bf16.msra.mxu0 %v1381
    %1392 = vmatprep.subr.bf16.mxu0 0
    %1393 = vmatpush1.bf16.msra.mxu0 %v1380
    %1394 = vmatprep.subr.bf16.mxu0 0
    %1395 = vmatpush1.bf16.msra.mxu0 %v1379
    %1396 = vmatprep.subr.bf16.mxu0 0
    %1397 = vmatpush1.bf16.msra.mxu0 %v1378
    %1398 = vmatprep.subr.bf16.mxu0 0
    %1399 = vmatpush1.bf16.msra.mxu0 %v1377
    %1400 = vmatprep.subr.bf16.mxu0 0
    %1401 = vmatpush1.bf16.msra.mxu0 %v1376
    %1402 = vmatprep.subr.bf16.mxu0 0
    %1403 = vmatpush1.bf16.msra.mxu0 %v1375
    %1404 = vmatprep.subr.bf16.mxu0 0
    %1405 = vmatpush1.bf16.msra.mxu0 %v1374
    %1406 = vmatprep.subr.bf16.mxu0 0
    %1407 = vmatpush2.bf16.msra.mxu0 0
    %1408 = vmatprep.subr.bf16.mxu0 0
    %1409 = vmatpush2.bf16.msra.mxu0 0
    %1410 = vmatprep.subr.bf16.mxu0 0
    %1411 = vmatpush2.bf16.msra.mxu0 0
    %1412 = vmatprep.subr.bf16.mxu0 0
    %1413 = vmatpush2.bf16.msra.mxu0 0
    %1414 = vmatprep.subr.bf16.mxu0 0
    %1415 = vmatpush2.bf16.msra.mxu0 0
    %1416 = vmatprep.subr.bf16.mxu0 0
    %1417 = vmatpush2.bf16.msra.mxu0 0
    %1418 = vmatprep.subr.bf16.mxu0 0
    %1419 = vmatpush2.bf16.msra.mxu0 0
    %1420 = vmatprep.subr.bf16.mxu0 0
    %1421 = vmatpush2.bf16.msra.mxu0 0
    %1422 = vmatprep.mubr.bf16.mxu0 0
    %1423 = vmatmul.mubr.bf16.gmra.mxu0 %v1325
    %v1424 = vpop.f32.mrf.mxu0
    %v1425 = vadd.f32 0.0, %v1424
    %v1426 = vpop.f32.mrf.mxu0
    %v1427 = vpop.f32.mrf.mxu0
    %v1428 = vadd.f32 0.0, %v1427
    %v1429 = vpop.f32.mrf.mxu0
    %1430 = vdwg.mxu0
    %1431 = vst [vmem:[%s4] sm:$0xff] %v1425
    %1432 = vst [vmem:[%s4 + $0x8] sm:$0xff] %v1428
    // Predicated region
    $region30: #{mlp_with_uncertainty_forward.1} parent=1 // pred_check
      _
    $region31: #{mlp_with_uncertainty_forward.1} parent=1 // pred_check_branch
      %1434 = sbr.rel (0) target = $region33
    $region32: #{mlp_with_uncertainty_forward.1} parent=1 // pred_region
      _
    $region33: #{mlp_with_uncertainty_forward.1} parent=1 // pred_fallthru
      _
    // Predicated region
    $region34: #{mlp_with_uncertainty_forward.1} parent=1 // pred_check
      _
    $region35: #{mlp_with_uncertainty_forward.1} parent=1 // pred_check_branch
      %1436 = sbr.rel (0) target = $region37
    $region36: #{mlp_with_uncertainty_forward.1} parent=1 // pred_region
      _
    $region37: #{mlp_with_uncertainty_forward.1} parent=1 // pred_fallthru
      _
    %1437 = vsyncpa [#allocation3], 1
    %1438 = vsyncpa [#allocation5], 1

</llo_original>
